<compile_context>
chip_gen: v7x
topology: tpu7x:2x2x1
jax: 0.10.0
libtpu: 0.0.40
codegen_flags: <defaults>
</compile_context>

<pallas_src>
import jax
import jax.numpy as jnp
from jax import lax
from jax.experimental import pallas as pl
from jax.experimental.pallas import tpu as pltpu

EPS = 1e-6


# ------------------------------ fused kernel --------------------------------

def _encoder_kernel(x_ref, m_ref, w_ref, b_ref, a2_ref, b2_ref, o_ref):
    """grid = (row_tiles,); the whole layer stack runs on one resident row tile."""
    n_layers = w_ref.shape[0]
    d = x_ref.shape[-1]

    m = m_ref[...].astype(jnp.float32)            # (tr, 1) mask, 0/1
    h0 = x_ref[...].astype(jnp.float32)           # (tr, D) activation tile

    # TODO(synk): the real EncoderLayer is injected into Encoder.__init__ and is
    # not defined in gpt/module.py; this is a deterministic residual
    # masked-linear stand-in with the same (x, mask) -> x contract.
    def layer_body(l, h):
        y = jnp.dot(h.astype(jnp.bfloat16), w_ref[l],          # bf16 MXU matmul
                    preferred_element_type=jnp.float32)
        y = y + b_ref[l].astype(jnp.float32)                    # (1, D) bias
        return h + y * m                                        # residual, masked

    h = lax.fori_loop(0, n_layers, layer_body, h0, unroll=True)

    # Final LayerNorm (PyTorch custom LayerNorm: unbiased std, eps added to std).
    mean = jnp.mean(h, axis=-1, keepdims=True)
    diff = h - mean
    var = jnp.sum(diff * diff, axis=-1, keepdims=True) / (d - 1)
    inv = pl.reciprocal(jnp.sqrt(var) + EPS, approx=True)       # EUP, not VALU
    o_ref[...] = (a2_ref[...].astype(jnp.float32) * diff * inv
                  + b2_ref[...].astype(jnp.float32)).astype(o_ref.dtype)


# ------------------------------ wrapper --------------------------------------

def _round_up(v, m):
    return ((v + m - 1) // m) * m


def encoder_forward(x, mask, w_stack, b_stack, norm_a, norm_b, *, tile_rows=512):
    """Mirrors Encoder.forward: N stacked layers then LayerNorm, in one kernel."""
    B, S, D = x.shape
    n_layers = w_stack.shape[0]
    rows = B * S

    # Parameters stored in bf16 in HBM -> native MXU rate + half the weight DMA.
    w_stack = w_stack.astype(jnp.bfloat16).reshape(n_layers, D, D)
    b_stack = b_stack.astype(jnp.bfloat16).reshape(n_layers, 1, D)

    x2d = x.reshape(rows, D)
    m2d = mask.reshape(rows, 1).astype(jnp.float32)

    # Row-tile size: multiple of 8, large for MXU occupancy, but keep >= 2 row
    # tiles when rows allow so v7x megacore shards the parallel axis on both TCs.
    tr = _round_up(min(tile_rows, rows), 8)
    half = _round_up(pl.cdiv(rows, 2), 8)
    if tr > half >= 8:
        tr = half

    padded_rows = pl.cdiv(rows, tr) * tr
    if padded_rows != rows:
        pad = padded_rows - rows
        x2d = jnp.pad(x2d, ((0, pad), (0, 0)))
        m2d = jnp.pad(m2d, ((0, pad), (0, 0)))     # padded rows masked to 0

    grid = (padded_rows // tr,)

    # VMEM budget: double-buffered row tiles + resident bf16 parameter stacks,
    # with headroom; clamp to <= 48 MiB so it is safe on v7x (64 MiB/TC).
    vmem_bytes = (2 * tr * D * 4                    # x tile (f32)
                  + 2 * tr * 128 * 4                # mask tile (lane-padded)
                  + 2 * tr * D * 4                  # out tile (f32)
                  + 2 * n_layers * D * D * 2        # weight stack (bf16)
                  + 2 * n_layers * 8 * 128 * 2      # bias stack (padded)
                  + 4 * 8 * 128 * 4)                # a_2 / b_2 (padded)
    vmem_limit = int(min(max(2 * vmem_bytes, 16 << 20), 48 << 20))

    out = pl.pallas_call(
        _encoder_kernel,
        out_shape=jax.ShapeDtypeStruct((padded_rows, D), jnp.float32),
        grid=grid,
        in_specs=[
            pl.BlockSpec((tr, D), lambda i: (i, 0)),               # x row tile
            pl.BlockSpec((tr, 1), lambda i: (i, 0)),               # mask row tile
            pl.BlockSpec((n_layers, D, D), lambda i: (0, 0, 0)),   # resident W stack
            pl.BlockSpec((n_layers, 1, D), lambda i: (0, 0, 0)),   # resident b stack
            pl.BlockSpec((1, D), lambda i: (0, 0)),                # a_2 (resident)
            pl.BlockSpec((1, D), lambda i: (0, 0)),                # b_2 (resident)
        ],
        out_specs=pl.BlockSpec((tr, D), lambda i: (i, 0)),
        compiler_params=pltpu.CompilerParams(
            dimension_semantics=("parallel",),
            vmem_limit_bytes=vmem_limit,
        ),
    )(x2d, m2d, w_stack, b_stack,
      norm_a.reshape(1, D).astype(jnp.float32),
      norm_b.reshape(1, D).astype(jnp.float32))

    return out[:rows].reshape(B, S, D).astype(x.dtype)


# ------------------------------ pure-JAX reference ---------------------------

def encoder_reference(x, mask, w_stack, b_stack, norm_a, norm_b):
    B, S, D = x.shape
    h = x.astype(jnp.float32)
    m = mask.reshape(B, S, 1).astype(jnp.float32)
    for l in range(w_stack.shape[0]):
        y = jnp.einsum("bsd,de->bse", h, w_stack[l].astype(jnp.float32),
                       precision="highest")
        y = y + b_stack[l].reshape(1, 1, D).astype(jnp.float32)
        h = h + y * m
    mean = jnp.mean(h, axis=-1, keepdims=True)
    diff = h - mean
    var = jnp.sum(diff * diff, axis=-1, keepdims=True) / (D - 1)
    std = jnp.sqrt(var)
    return norm_a * diff / (std + EPS) + norm_b


# -------------------------------- main ---------------------------------------

if __name__ == "__main__":
    B, S, D, N = 2, 128, 128, 2       # lane-dense feature axis (D % 128 == 0)

    key = jax.random.PRNGKey(0)
    kx, km, kw = jax.random.split(key, 3)

    x = jax.random.normal(kx, (B, S, D), dtype=jnp.float32)
    # 0/1 padding-style mask over sequence positions.
    mask = (jax.random.uniform(km, (B, S)) > 0.2).astype(jnp.float32)

    # Per-layer parameters stored in bf16 (HBM dtype used by the kernel); the
    # reference uses their exact f32 upcast.
    w_stack = (0.05 * jax.random.normal(kw, (N, D, D), dtype=jnp.float32)
               ).astype(jnp.bfloat16)
    b_stack = (0.01 * jnp.arange(1, N + 1, dtype=jnp.float32)[:, None, None]
               * jnp.ones((N, 1, D), dtype=jnp.float32)).astype(jnp.bfloat16)

    # LayerNorm params exactly as in __init__: ones / zeros.
    norm_a = jnp.ones((D,), dtype=jnp.float32)
    norm_b = jnp.zeros((D,), dtype=jnp.float32)

    out = encoder_forward(x, mask, w_stack, b_stack, norm_a, norm_b)  # grid=(2,)
    out = jax.block_until_ready(out)

    ref = encoder_reference(x, mask, w_stack.astype(jnp.float32),
                            b_stack.astype(jnp.float32), norm_a, norm_b)
    err = float(jnp.max(jnp.abs(out - ref)))

    assert out.shape == (B, S, D) and out.dtype == jnp.float32
    assert bool(jnp.all(jnp.isfinite(out)))
    assert err < 5e-2, f"max abs err vs reference: {err}"
    print("KERNEL_OK")
</pallas_src>

<mosaic_0001>
module attributes {stable_mosaic.version = 11 : i64} {
  func.func @_encoder_kernel(%arg0: i32, %arg1: memref<128x128xf32, #tpu.memory_space<vmem>>, %arg2: memref<128x1xf32, #tpu.memory_space<vmem>>, %arg3: memref<2x128x128xbf16, #tpu.memory_space<vmem>>, %arg4: memref<2x1x128xbf16, #tpu.memory_space<vmem>>, %arg5: memref<1x128xf32, #tpu.memory_space<vmem>>, %arg6: memref<1x128xf32, #tpu.memory_space<vmem>>, %arg7: memref<128x128xf32, #tpu.memory_space<vmem>>) attributes {dimension_semantics = [#tpu.dimension_semantics<parallel>], iteration_bounds = array<i64: 2>, scalar_prefetch = 0 : i64, scratch_operands = 0 : i64, tpu.core_type = #tpu.core_type<tc>, window_params = [{transform_indices = @transform_0, window_bounds = array<i64: 128, 128>}, {transform_indices = @transform_1, window_bounds = array<i64: 128, 1>}, {pipeline_mode = #tpu.pipeline_mode<synchronous>, transform_indices = @transform_2, window_bounds = array<i64: 2, 128, 128>}, {pipeline_mode = #tpu.pipeline_mode<synchronous>, transform_indices = @transform_3, window_bounds = array<i64: 2, 1, 128>}, {pipeline_mode = #tpu.pipeline_mode<synchronous>, transform_indices = @transform_4, window_bounds = array<i64: 1, 128>}, {pipeline_mode = #tpu.pipeline_mode<synchronous>, transform_indices = @transform_5, window_bounds = array<i64: 1, 128>}, {transform_indices = @transform_6, window_bounds = array<i64: 128, 128>}]} {
    %c0 = arith.constant 0 : index
    %c0_0 = arith.constant 0 : index
    %0 = vector.load %arg2[%c0, %c0_0] : memref<128x1xf32, #tpu.memory_space<vmem>>, vector<128x1xf32>
    %c0_1 = arith.constant 0 : index
    %c0_2 = arith.constant 0 : index
    %1 = vector.load %arg1[%c0_1, %c0_2] : memref<128x128xf32, #tpu.memory_space<vmem>>, vector<128x128xf32>
    %c0_i32 = arith.constant 0 : i32
    %2 = arith.truncf %1 : vector<128x128xf32> to vector<128x128xbf16>
    %3 = arith.index_cast %c0_i32 : i32 to index
    %c0_3 = arith.constant 0 : index
    %c0_4 = arith.constant 0 : index
    %4 = vector.load %arg3[%3, %c0_3, %c0_4] : memref<2x128x128xbf16, #tpu.memory_space<vmem>>, vector<1x128x128xbf16>
    %5 = vector.shape_cast %4 : vector<1x128x128xbf16> to vector<128x128xbf16>
    %cst = arith.constant dense<0.000000e+00> : vector<128x128xf32>
    %6 = tpu.matmul %2, %5, %cst {dimension_numbers = #tpu.dot_dimension_numbers<[1], [0], [0], [1], [0, 0, 1, 1], [], []>} : vector<128x128xbf16>, vector<128x128xbf16>, vector<128x128xf32> -> vector<128x128xf32>
    %7 = arith.index_cast %c0_i32 : i32 to index
    %c0_5 = arith.constant 0 : index
    %c0_6 = arith.constant 0 : index
    %8 = vector.load %arg4[%7, %c0_5, %c0_6] : memref<2x1x128xbf16, #tpu.memory_space<vmem>>, vector<1x1x128xbf16>
    %9 = vector.shape_cast %8 : vector<1x1x128xbf16> to vector<1x128xbf16>
    %10 = arith.extf %9 : vector<1x128xbf16> to vector<1x128xf32>
    %11 = vector.broadcast %10 : vector<1x128xf32> to vector<128x128xf32>
    %12 = arith.addf %6, %11 : vector<128x128xf32>
    %13 = vector.broadcast %0 : vector<128x1xf32> to vector<128x128xf32>
    %14 = arith.mulf %12, %13 : vector<128x128xf32>
    %15 = arith.addf %1, %14 : vector<128x128xf32>
    %c1_i32 = arith.constant 1 : i32
    %16 = arith.truncf %15 : vector<128x128xf32> to vector<128x128xbf16>
    %17 = arith.index_cast %c1_i32 : i32 to index
    %c0_7 = arith.constant 0 : index
    %c0_8 = arith.constant 0 : index
    %18 = vector.load %arg3[%17, %c0_7, %c0_8] : memref<2x128x128xbf16, #tpu.memory_space<vmem>>, vector<1x128x128xbf16>
    %19 = vector.shape_cast %18 : vector<1x128x128xbf16> to vector<128x128xbf16>
    %cst_9 = arith.constant dense<0.000000e+00> : vector<128x128xf32>
    %20 = tpu.matmul %16, %19, %cst_9 {dimension_numbers = #tpu.dot_dimension_numbers<[1], [0], [0], [1], [0, 0, 1, 1], [], []>} : vector<128x128xbf16>, vector<128x128xbf16>, vector<128x128xf32> -> vector<128x128xf32>
    %21 = arith.index_cast %c1_i32 : i32 to index
    %c0_10 = arith.constant 0 : index
    %c0_11 = arith.constant 0 : index
    %22 = vector.load %arg4[%21, %c0_10, %c0_11] : memref<2x1x128xbf16, #tpu.memory_space<vmem>>, vector<1x1x128xbf16>
    %23 = vector.shape_cast %22 : vector<1x1x128xbf16> to vector<1x128xbf16>
    %24 = arith.extf %23 : vector<1x128xbf16> to vector<1x128xf32>
    %25 = vector.broadcast %24 : vector<1x128xf32> to vector<128x128xf32>
    %26 = arith.addf %20, %25 : vector<128x128xf32>
    %27 = vector.broadcast %0 : vector<128x1xf32> to vector<128x128xf32>
    %28 = arith.mulf %26, %27 : vector<128x128xf32>
    %29 = arith.addf %15, %28 : vector<128x128xf32>
    %c2_i32 = arith.constant 2 : i32
    %cst_12 = arith.constant dense<0.000000e+00> : vector<128xf32>
    %30 = vector.multi_reduction <add>, %29, %cst_12 [1] : vector<128x128xf32> to vector<128xf32>
    %31 = vector.shape_cast %30 : vector<128xf32> to vector<128x1xf32>
    %cst_13 = arith.constant 1.280000e+02 : f32
    %32 = vector.broadcast %cst_13 : f32 to vector<128x1xf32>
    %33 = arith.divf %31, %32 : vector<128x1xf32>
    %34 = vector.broadcast %33 : vector<128x1xf32> to vector<128x128xf32>
    %35 = arith.subf %29, %34 : vector<128x128xf32>
    %36 = arith.mulf %35, %35 : vector<128x128xf32>
    %cst_14 = arith.constant dense<0.000000e+00> : vector<128xf32>
    %37 = vector.multi_reduction <add>, %36, %cst_14 [1] : vector<128x128xf32> to vector<128xf32>
    %38 = vector.shape_cast %37 : vector<128xf32> to vector<128x1xf32>
    %cst_15 = arith.constant 1.270000e+02 : f32
    %39 = vector.broadcast %cst_15 : f32 to vector<128x1xf32>
    %40 = arith.divf %38, %39 : vector<128x1xf32>
    %41 = math.sqrt %40 : vector<128x1xf32>
    %cst_16 = arith.constant 9.99999997E-7 : f32
    %42 = vector.broadcast %cst_16 : f32 to vector<128x1xf32>
    %43 = arith.addf %41, %42 : vector<128x1xf32>
    %44 = tpu.reciprocal %43 {approx = true} : vector<128x1xf32> -> vector<128x1xf32>
    %c0_17 = arith.constant 0 : index
    %c0_18 = arith.constant 0 : index
    %45 = vector.load %arg5[%c0_17, %c0_18] : memref<1x128xf32, #tpu.memory_space<vmem>>, vector<1x128xf32>
    %46 = vector.broadcast %45 : vector<1x128xf32> to vector<128x128xf32>
    %47 = arith.mulf %46, %35 : vector<128x128xf32>
    %48 = vector.broadcast %44 : vector<128x1xf32> to vector<128x128xf32>
    %49 = arith.mulf %47, %48 : vector<128x128xf32>
    %c0_19 = arith.constant 0 : index
    %c0_20 = arith.constant 0 : index
    %50 = vector.load %arg6[%c0_19, %c0_20] : memref<1x128xf32, #tpu.memory_space<vmem>>, vector<1x128xf32>
    %51 = vector.broadcast %50 : vector<1x128xf32> to vector<128x128xf32>
    %52 = arith.addf %49, %51 : vector<128x128xf32>
    %c0_21 = arith.constant 0 : index
    %c0_22 = arith.constant 0 : index
    %53 = vector.load %arg7[%c0_21, %c0_22] : memref<128x128xf32, #tpu.memory_space<vmem>>, vector<128x128xf32>
    tpu.vector_store %arg7[%c0_21, %c0_22], %52 {strides = array<i32>} : memref<128x128xf32, #tpu.memory_space<vmem>>, vector<128x128xf32>,
    return
  }
  func.func @transform_0(%arg0: i32) -> (i32, i32) {
    %c0_i32 = arith.constant 0 : i32
    %c0_i32_0 = arith.constant 0 : i32
    return %arg0, %c0_i32 : i32, i32
  }
  func.func @transform_1(%arg0: i32) -> (i32, i32) {
    %c0_i32 = arith.constant 0 : i32
    %c0_i32_0 = arith.constant 0 : i32
    return %arg0, %c0_i32 : i32, i32
  }
  func.func @transform_2(%arg0: i32) -> (i32, i32, i32) {
    %c0_i32 = arith.constant 0 : i32
    %c0_i32_0 = arith.constant 0 : i32
    %c0_i32_1 = arith.constant 0 : i32
    %c0_i32_2 = arith.constant 0 : i32
    return %c0_i32, %c0_i32_0, %c0_i32_1 : i32, i32, i32
  }
  func.func @transform_3(%arg0: i32) -> (i32, i32, i32) {
    %c0_i32 = arith.constant 0 : i32
    %c0_i32_0 = arith.constant 0 : i32
    %c0_i32_1 = arith.constant 0 : i32
    %c0_i32_2 = arith.constant 0 : i32
    return %c0_i32, %c0_i32_0, %c0_i32_1 : i32, i32, i32
  }
  func.func @transform_4(%arg0: i32) -> (i32, i32) {
    %c0_i32 = arith.constant 0 : i32
    %c0_i32_0 = arith.constant 0 : i32
    %c0_i32_1 = arith.constant 0 : i32
    return %c0_i32, %c0_i32_0 : i32, i32
  }
  func.func @transform_5(%arg0: i32) -> (i32, i32) {
    %c0_i32 = arith.constant 0 : i32
    %c0_i32_0 = arith.constant 0 : i32
    %c0_i32_1 = arith.constant 0 : i32
    return %c0_i32, %c0_i32_0 : i32, i32
  }
  func.func @transform_6(%arg0: i32) -> (i32, i32) {
    %c0_i32 = arith.constant 0 : i32
    %c0_i32_0 = arith.constant 0 : i32
    return %arg0, %c0_i32 : i32, i32
  }
}

</mosaic_0001>

<llo_original>
// kernel: tpu_custom_call.1
$region0: #{tpu_custom_call.1}
  #allocation0 [shape = 'u32[]', space=smem, size = 0x4, offset = 0x4, fixed_abs, tag = 'smem constant byte address 0x4 - core index']
  #allocation1 [shape = 'u32[144,128]{1,0:T(1,128)}', space=vmem, size = 0x12000, scoped, tag = 'internal scratch']
  %s0 = inlined_call_operand.vmem [shape: f32[256,128], index: 0, kind: input, shape index: {}]
  %s1 = inlined_call_operand.vmem [shape: f32[256,1], index: 1, kind: input, shape index: {}]
  %s2 = inlined_call_operand.hbm [shape: bf16[2,128,128], index: 2, kind: input, shape index: {}]
  %s3 = inlined_call_operand.vmem [shape: bf16[2,1,128], index: 3, kind: input, shape index: {}]
  %s4 = inlined_call_operand.vmem [shape: f32[1,128], index: 4, kind: input, shape index: {}]
  %s5 = inlined_call_operand.vmem [shape: f32[1,128], index: 5, kind: input, shape index: {}]
  %s6 = inlined_call_operand.hbm [shape: f32[256,128], index: 6, kind: output, shape index: {}]
  %s7 = sld [smem:[#allocation0]]
  $region61: #{tpu_custom_call.1} parent=0
    _
  %s9 = ssub.s32 1, %s7
  %s10 = scalar_select 0, %s9, %s7
  $region1: #{tpu_custom_call.1} parent=0
    #allocation2 [shape = 'u8[65536]{0}', space=vmem, size = 0x10000, scoped, tag = 'input window, operand 2, single buffered']
    #allocation3 [shape = 's32[2]{0}', space=sflag, size = 0x8, scoped, tag = 'scoped memory for tpu_custom_call.1']
    #allocation4 [shape = 's32[2]{0}', space=sflag, size = 0x8, scoped, tag = 'scoped memory for tpu_custom_call.1']
    #allocation5 [shape = 'u8[131072]{0}', space=vmem, size = 0x20000, scoped, tag = 'output window, operand 0']
    %11 = vsyncpa [#allocation3], 0
    %12 = vsyncpa [#allocation4], 0
    %s13 = scalar_lea.sflag [#allocation4], 1
    %14 = vsyncpa %s13, 0
    loop: start=0, step=1, limit=4
    $region2: #{tpu_custom_call.1} parent=1 // loop_pre_header
      _
    $region3: #{tpu_custom_call.1} parent=1 // loop_header
      %s16 = sphi 0, %s20
      %p17 = scmp.ge.s32.totalorder %s16, 4
      %s26 = sphi 0, %s28
      %s29 = sphi 0, %s26
      %s30 = sphi 0, %s29
      %s46 = sphi 0, %s30
      %s52 = sphi 0, %s54
      %s55 = sphi 0, %s52
      %s56 = sphi 0, %s55
      %s72 = sphi 0, %s56
      %s76 = sphi 0, %s76
      %s78 = sphi 0, %s76
      %s79 = sphi 0, %s78
      %s93 = sphi 0, %s79
      %s97 = sphi 0, %s97
      %s99 = sphi 0, %s97
      %s100 = sphi 0, %s99
      %s114 = sphi 0, %s100
      %s118 = sphi 0, %s118
      %s120 = sphi 0, %s118
      %s121 = sphi 0, %s120
      %s135 = sphi 0, %s121
      %s139 = sphi 0, %s139
      %s141 = sphi 0, %s139
      %s142 = sphi 0, %s141
      %s156 = sphi 0, %s142
      %s162 = sphi 0, %s164
      %s165 = sphi 0, %s162
      %s166 = sphi 0, %s165
      %s182 = sphi 0, %s166
    $region4: #{tpu_custom_call.1} parent=1 // loop_header_branch
      %19 = sbr.rel (%p17) target = $region8
    $region5: #{tpu_custom_call.1} parent=1 // loop_body
      %s21 = ssub.s32 %s16, 1
      %s22 = ssub.s32 %s16, 2
      %s23 = sadd.s32 %s16, 1
      %s24 = ssub.s32 %s16, %s23
      %p25 = scmp.eq.s32.totalorder %s24, 0
      %s27 = sadd.s32 %s26, 1
      %s28 = scalar_select %p25, %s26, %s27
      %p31 = pneg %p25
      %p32 = scmp.eq.s32.totalorder %s16, 1
      %p33 = por %p31, %p32
      %p34 = scmp.ne.s32.totalorder %s26, %s29
      %p35 = scmp.eq.s32.totalorder %s16, 0
      %p36 = por %p34, %p35
      %p37 = scmp.ne.s32.totalorder %s26, %s29
      %p38 = scmp.eq.s32.totalorder %s21, 1
      %p39 = por %p37, %p38
      %p40 = scmp.ne.s32.totalorder %s29, %s30
      %p41 = scmp.eq.s32.totalorder %s21, 0
      %p42 = por %p40, %p41
      %p43 = scmp.ne.s32.totalorder %s29, %s30
      %p44 = scmp.eq.s32.totalorder %s22, 1
      %p45 = por %p43, %p44
      %p47 = scmp.ne.s32.totalorder %s30, %s46
      %p48 = scmp.eq.s32.totalorder %s22, 0
      %p49 = por %p47, %p48
      %s50 = ssub.s32 %s16, %s23
      %p51 = scmp.eq.s32.totalorder %s50, 0
      %s53 = sadd.s32 %s52, 1
      %s54 = scalar_select %p51, %s52, %s53
      %p57 = pneg %p51
      %p58 = scmp.eq.s32.totalorder %s16, 1
      %p59 = por %p57, %p58
      %p60 = scmp.ne.s32.totalorder %s52, %s55
      %p61 = scmp.eq.s32.totalorder %s16, 0
      %p62 = por %p60, %p61
      %p63 = scmp.ne.s32.totalorder %s52, %s55
      %p64 = scmp.eq.s32.totalorder %s21, 1
      %p65 = por %p63, %p64
      %p66 = scmp.ne.s32.totalorder %s55, %s56
      %p67 = scmp.eq.s32.totalorder %s21, 0
      %p68 = por %p66, %p67
      %p69 = scmp.ne.s32.totalorder %s55, %s56
      %p70 = scmp.eq.s32.totalorder %s22, 1
      %p71 = por %p69, %p70
      %p73 = scmp.ne.s32.totalorder %s56, %s72
      %p74 = scmp.eq.s32.totalorder %s22, 0
      %p75 = por %p73, %p74
      %s77 = sadd.s32 %s76, 1
      %p80 = scmp.eq.s32.totalorder %s16, 1
      %p81 = scmp.ne.s32.totalorder %s76, %s78
      %p82 = scmp.eq.s32.totalorder %s16, 0
      %p83 = por %p81, %p82
      %p84 = scmp.ne.s32.totalorder %s76, %s78
      %p85 = scmp.eq.s32.totalorder %s21, 1
      %p86 = por %p84, %p85
      %p87 = scmp.ne.s32.totalorder %s78, %s79
      %p88 = scmp.eq.s32.totalorder %s21, 0
      %p89 = por %p87, %p88
      %p90 = scmp.ne.s32.totalorder %s78, %s79
      %p91 = scmp.eq.s32.totalorder %s22, 1
      %p92 = por %p90, %p91
      %p94 = scmp.ne.s32.totalorder %s79, %s93
      %p95 = scmp.eq.s32.totalorder %s22, 0
      %p96 = por %p94, %p95
      %s98 = sadd.s32 %s97, 1
      %p101 = scmp.eq.s32.totalorder %s16, 1
      %p102 = scmp.ne.s32.totalorder %s97, %s99
      %p103 = scmp.eq.s32.totalorder %s16, 0
      %p104 = por %p102, %p103
      %p105 = scmp.ne.s32.totalorder %s97, %s99
      %p106 = scmp.eq.s32.totalorder %s21, 1
      %p107 = por %p105, %p106
      %p108 = scmp.ne.s32.totalorder %s99, %s100
      %p109 = scmp.eq.s32.totalorder %s21, 0
      %p110 = por %p108, %p109
      %p111 = scmp.ne.s32.totalorder %s99, %s100
      %p112 = scmp.eq.s32.totalorder %s22, 1
      %p113 = por %p111, %p112
      %p115 = scmp.ne.s32.totalorder %s100, %s114
      %p116 = scmp.eq.s32.totalorder %s22, 0
      %p117 = por %p115, %p116
      %s119 = sadd.s32 %s118, 1
      %p122 = scmp.eq.s32.totalorder %s16, 1
      %p123 = scmp.ne.s32.totalorder %s118, %s120
      %p124 = scmp.eq.s32.totalorder %s16, 0
      %p125 = por %p123, %p124
      %p126 = scmp.ne.s32.totalorder %s118, %s120
      %p127 = scmp.eq.s32.totalorder %s21, 1
      %p128 = por %p126, %p127
      %p129 = scmp.ne.s32.totalorder %s120, %s121
      %p130 = scmp.eq.s32.totalorder %s21, 0
      %p131 = por %p129, %p130
      %p132 = scmp.ne.s32.totalorder %s120, %s121
      %p133 = scmp.eq.s32.totalorder %s22, 1
      %p134 = por %p132, %p133
      %p136 = scmp.ne.s32.totalorder %s121, %s135
      %p137 = scmp.eq.s32.totalorder %s22, 0
      %p138 = por %p136, %p137
      %s140 = sadd.s32 %s139, 1
      %p143 = scmp.eq.s32.totalorder %s16, 1
      %p144 = scmp.ne.s32.totalorder %s139, %s141
      %p145 = scmp.eq.s32.totalorder %s16, 0
      %p146 = por %p144, %p145
      %p147 = scmp.ne.s32.totalorder %s139, %s141
      %p148 = scmp.eq.s32.totalorder %s21, 1
      %p149 = por %p147, %p148
      %p150 = scmp.ne.s32.totalorder %s141, %s142
      %p151 = scmp.eq.s32.totalorder %s21, 0
      %p152 = por %p150, %p151
      %p153 = scmp.ne.s32.totalorder %s141, %s142
      %p154 = scmp.eq.s32.totalorder %s22, 1
      %p155 = por %p153, %p154
      %p157 = scmp.ne.s32.totalorder %s142, %s156
      %p158 = scmp.eq.s32.totalorder %s22, 0
      %p159 = por %p157, %p158
      %s160 = ssub.s32 %s16, %s23
      %p161 = scmp.eq.s32.totalorder %s160, 0
      %s163 = sadd.s32 %s162, 1
      %s164 = scalar_select %p161, %s162, %s163
      %p167 = pneg %p161
      %p168 = scmp.eq.s32.totalorder %s16, 1
      %p169 = por %p167, %p168
      %p170 = scmp.ne.s32.totalorder %s162, %s165
      %p171 = scmp.eq.s32.totalorder %s16, 0
      %p172 = por %p170, %p171
      %p173 = scmp.ne.s32.totalorder %s162, %s165
      %p174 = scmp.eq.s32.totalorder %s21, 1
      %p175 = por %p173, %p174
      %p176 = scmp.ne.s32.totalorder %s165, %s166
      %p177 = scmp.eq.s32.totalorder %s21, 0
      %p178 = por %p176, %p177
      %p179 = scmp.ne.s32.totalorder %s165, %s166
      %p180 = scmp.eq.s32.totalorder %s22, 1
      %p181 = por %p179, %p180
      %p183 = scmp.ne.s32.totalorder %s166, %s182
      %p184 = scmp.eq.s32.totalorder %s22, 0
      %p185 = por %p183, %p184
      %p186 = scmp.le.s32.totalorder 1, %s16
      %p187 = scmp.lt.s32.totalorder %s16, 3
      %p188 = pnand %p186, %p187
      %p189 = pneg %p188
      // Predicated region
      $region9: #{tpu_custom_call.1} parent=5 // pred_check
        _
      $region10: #{tpu_custom_call.1} parent=5 // pred_check_branch
        %191 = sbr.rel (%p188) target = $region12
      $region11: #{tpu_custom_call.1} parent=5 // pred_region
        %s192 = ssub.s32 %s16, 1
        // Predicated region
        $region13: #{tpu_custom_call.1} parent=11 // pred_check
          %p193 = pneg %p89
        $region14: #{tpu_custom_call.1} parent=11 // pred_check_branch
          %195 = sbr.rel (%p193) target = $region16
        $region15: #{tpu_custom_call.1} parent=11 // pred_region
          %s197 = ssub.s32 2048, 2048
          %198 = vsyncadd [#allocation3], %s197
          %s199 = sshll.u32 [#allocation2], 4
          %s200 = int_to_ptr.vmem [resolvable:$true] %s199
          %205 = dma.hbm_to_vmem [thread:$0]  %s2, 2048, %s200, [#allocation3], 64, 64, 4
        $region16: #{tpu_custom_call.1} parent=11 // pred_fallthru
          _
        // Predicated region
        $region17: #{tpu_custom_call.1} parent=11 // pred_check
          %p206 = pneg %p110
        $region18: #{tpu_custom_call.1} parent=11 // pred_check_branch
          %208 = sbr.rel (%p206) target = $region20
        $region19: #{tpu_custom_call.1} parent=11 // pred_region
          _
        $region20: #{tpu_custom_call.1} parent=11 // pred_fallthru
          _
        // Predicated region
        $region21: #{tpu_custom_call.1} parent=11 // pred_check
          %p209 = pneg %p131
        $region22: #{tpu_custom_call.1} parent=11 // pred_check_branch
          %211 = sbr.rel (%p209) target = $region24
        $region23: #{tpu_custom_call.1} parent=11 // pred_region
          _
        $region24: #{tpu_custom_call.1} parent=11 // pred_fallthru
          _
        // Predicated region
        $region25: #{tpu_custom_call.1} parent=11 // pred_check
          %p212 = pneg %p152
        $region26: #{tpu_custom_call.1} parent=11 // pred_check_branch
          %214 = sbr.rel (%p212) target = $region28
        $region27: #{tpu_custom_call.1} parent=11 // pred_region
          _
        $region28: #{tpu_custom_call.1} parent=11 // pred_fallthru
          _
      $region12: #{tpu_custom_call.1} parent=5 // pred_fallthru
        _
      %p215 = scmp.lt.s32.totalorder %s16, 2
      // Predicated region
      $region29: #{tpu_custom_call.1} parent=5 // pred_check
        %p216 = pneg %p215
      $region30: #{tpu_custom_call.1} parent=5 // pred_check_branch
        %218 = sbr.rel (%p216) target = $region32
      $region31: #{tpu_custom_call.1} parent=5 // pred_region
        // Predicated region
        $region33: #{tpu_custom_call.1} parent=31 // pred_check
          %p219 = pneg %p36
        $region34: #{tpu_custom_call.1} parent=31 // pred_check_branch
          %221 = sbr.rel (%p219) target = $region36
        $region35: #{tpu_custom_call.1} parent=31 // pred_region
          %s222 = smul.u32 16, %s16
          %p223 = scmp.lt.s32.totalorder %s222, 31
          %s224 = scalar_select %p223, %s222, 31
          %s225 = smul.addr %s224, 8
          %s226 = scalar_lea.vmem %s0, %s225
          %s227 = smul.u32 16, %s16
        $region36: #{tpu_custom_call.1} parent=31 // pred_fallthru
          _
        // Predicated region
        $region37: #{tpu_custom_call.1} parent=31 // pred_check
          %p228 = pneg %p62
        $region38: #{tpu_custom_call.1} parent=31 // pred_check_branch
          %230 = sbr.rel (%p228) target = $region40
        $region39: #{tpu_custom_call.1} parent=31 // pred_region
          %s231 = smul.u32 16, %s16
          %p232 = scmp.lt.s32.totalorder %s231, 31
          %s233 = scalar_select %p232, %s231, 31
          %s234 = smul.addr %s233, 8
          %s235 = scalar_lea.vmem %s1, %s234
          %s236 = smul.u32 16, %s16
        $region40: #{tpu_custom_call.1} parent=31 // pred_fallthru
          _
      $region32: #{tpu_custom_call.1} parent=5 // pred_fallthru
        _
      %p237 = scmp.le.s32.totalorder 1, %s16
      %p238 = scmp.lt.s32.totalorder %s16, 3
      %p239 = pnand %p237, %p238
      %p240 = pneg %p239
      // Predicated region
      $region41: #{tpu_custom_call.1} parent=5 // pred_check
        _
      $region42: #{tpu_custom_call.1} parent=5 // pred_check_branch
        %242 = sbr.rel (%p239) target = $region44
      $region43: #{tpu_custom_call.1} parent=5 // pred_region
        %s243 = ssub.s32 %s16, 1
        // Predicated region
        $region45: #{tpu_custom_call.1} parent=43 // pred_check
          %p244 = pneg %p89
        $region46: #{tpu_custom_call.1} parent=43 // pred_check_branch
          %246 = sbr.rel (%p244) target = $region48
        $region47: #{tpu_custom_call.1} parent=43 // pred_region
          %247 = dma.done [#allocation3], 2048
        $region48: #{tpu_custom_call.1} parent=43 // pred_fallthru
          _
        %s248 = smul.u32 16, %s21
        %p249 = scmp.lt.s32.totalorder %s248, 31
        %s250 = scalar_select %p249, %s248, 31
        %s251 = smul.addr %s250, 8
        %s252 = scalar_lea.vmem %s0, %s251
        %p253 = pneg %p42
        %p254 = pneg %p39
        %s255 = smul.u32 16, %s21
        %p256 = scmp.lt.s32.totalorder %s255, 31
        %s257 = scalar_select %p256, %s255, 31
        %s258 = smul.addr %s257, 8
        %s259 = scalar_lea.vmem %s1, %s258
        %p260 = pneg %p68
        %p261 = pneg %p65
        %p262 = pneg %p89
        %p263 = pneg %p86
        %p264 = pneg %p110
        %p265 = pneg %p107
        %p266 = pneg %p131
        %p267 = pneg %p128
        %p268 = pneg %p152
        %p269 = pneg %p149
        %p270 = pneg %p178
        %p271 = pneg %p175
        %s272 = sand.u32 %s165, 1
        %s273 = scalar_lea.sflag [#allocation4], %s272
        %s274 = sand.u32 %s165, 1
        %s275 = smul.addr %s274, 128
        %s276 = scalar_lea.vmem [#allocation5], %s275
        %s277 = smul.u32 16, %s21
        %p278 = scmp.lt.s32.totalorder %s277, 31
        %s279 = scalar_select %p278, %s277, 31
        %s280 = smul.addr %s279, 8
        %s281 = scalar_lea.vmem %s0, %s280
        %s282 = smul.u32 16, %s21
        %s283 = smul.u32 16, %s21
        %p284 = scmp.lt.s32.totalorder %s283, 31
        %s285 = scalar_select %p284, %s283, 31
        %s286 = smul.addr %s285, 8
        %s287 = scalar_lea.vmem %s1, %s286
        %s288 = smul.u32 16, %s21
        %s289 = smul.u32 16, %s21
        %v291 = vld [vmem:[%s287] sm:$0xff]
        %v292 = vld [vmem:[%s287 + $0x8] sm:$0xff]
        %v293 = vld [vmem:[%s287 + $0x10] sm:$0xff]
        %v294 = vld [vmem:[%s287 + $0x18] sm:$0xff]
        %v295 = vld [vmem:[%s287 + $0x20] sm:$0xff]
        %v296 = vld [vmem:[%s287 + $0x28] sm:$0xff]
        %v297 = vld [vmem:[%s287 + $0x30] sm:$0xff]
        %v298 = vld [vmem:[%s287 + $0x38] sm:$0xff]
        %v299 = vld [vmem:[%s287 + $0x40] sm:$0xff]
        %v300 = vld [vmem:[%s287 + $0x48] sm:$0xff]
        %v301 = vld [vmem:[%s287 + $0x50] sm:$0xff]
        %v302 = vld [vmem:[%s287 + $0x58] sm:$0xff]
        %v303 = vld [vmem:[%s287 + $0x60] sm:$0xff]
        %v304 = vld [vmem:[%s287 + $0x68] sm:$0xff]
        %v305 = vld [vmem:[%s287 + $0x70] sm:$0xff]
        %v306 = vld [vmem:[%s287 + $0x78] sm:$0xff]
        %v307 = vld [vmem:[%s281] sm:$0xff]
        %v308 = vld [vmem:[%s281 + $0x8] sm:$0xff]
        %v309 = vld [vmem:[%s281 + $0x10] sm:$0xff]
        %v310 = vld [vmem:[%s281 + $0x18] sm:$0xff]
        %v311 = vld [vmem:[%s281 + $0x20] sm:$0xff]
        %v312 = vld [vmem:[%s281 + $0x28] sm:$0xff]
        %v313 = vld [vmem:[%s281 + $0x30] sm:$0xff]
        %v314 = vld [vmem:[%s281 + $0x38] sm:$0xff]
        %v315 = vld [vmem:[%s281 + $0x40] sm:$0xff]
        %v316 = vld [vmem:[%s281 + $0x48] sm:$0xff]
        %v317 = vld [vmem:[%s281 + $0x50] sm:$0xff]
        %v318 = vld [vmem:[%s281 + $0x58] sm:$0xff]
        %v319 = vld [vmem:[%s281 + $0x60] sm:$0xff]
        %v320 = vld [vmem:[%s281 + $0x68] sm:$0xff]
        %v321 = vld [vmem:[%s281 + $0x70] sm:$0xff]
        %v322 = vld [vmem:[%s281 + $0x78] sm:$0xff]
        %v323 = vpack.c.bf16 %v308, %v307
        %v324 = vpack.c.bf16 %v310, %v309
        %v325 = vpack.c.bf16 %v312, %v311
        %v326 = vpack.c.bf16 %v314, %v313
        %v327 = vpack.c.bf16 %v316, %v315
        %v328 = vpack.c.bf16 %v318, %v317
        %v329 = vpack.c.bf16 %v320, %v319
        %v330 = vpack.c.bf16 %v322, %v321
        %v331 = vld [vmem:[#allocation2] sm:$0xf]
        %v332 = vld [vmem:[#allocation2 + $0x4] sm:$0xf]
        %v333 = vld [vmem:[#allocation2 + $0x8] sm:$0xf]
        %v334 = vld [vmem:[#allocation2 + $0xc] sm:$0xf]
        %v335 = vld [vmem:[#allocation2 + $0x10] sm:$0xf]
        %v336 = vld [vmem:[#allocation2 + $0x14] sm:$0xf]
        %v337 = vld [vmem:[#allocation2 + $0x18] sm:$0xf]
        %v338 = vld [vmem:[#allocation2 + $0x1c] sm:$0xf]
        %v339 = vld [vmem:[#allocation2 + $0x20] sm:$0xf]
        %v340 = vld [vmem:[#allocation2 + $0x24] sm:$0xf]
        %v341 = vld [vmem:[#allocation2 + $0x28] sm:$0xf]
        %v342 = vld [vmem:[#allocation2 + $0x2c] sm:$0xf]
        %v343 = vld [vmem:[#allocation2 + $0x30] sm:$0xf]
        %v344 = vld [vmem:[#allocation2 + $0x34] sm:$0xf]
        %v345 = vld [vmem:[#allocation2 + $0x38] sm:$0xf]
        %v346 = vld [vmem:[#allocation2 + $0x3c] sm:$0xf]
        %v347 = vld [vmem:[%s3] sm:$0x1]
        %v348 = vunpack.c.l.bf16 %v347
        %v349 = vlaneseq
        %v350 = vshrl.u32 %v349, 7
        %v351 = vsub.s32 0, %v350
        %v352 = vrot.slane %v348, %v351
        %v369 = vunpack.c.l.b16 %v331
        %v370 = vunpack.c.l.b16 %v332
        %v371 = vunpack.c.l.b16 %v333
        %v372 = vunpack.c.l.b16 %v334
        %v373 = vunpack.c.l.b16 %v335
        %v374 = vunpack.c.l.b16 %v336
        %v375 = vunpack.c.l.b16 %v337
        %v376 = vunpack.c.l.b16 %v338
        %v377 = vunpack.c.l.b16 %v339
        %v378 = vunpack.c.l.b16 %v340
        %v379 = vunpack.c.l.b16 %v341
        %v380 = vunpack.c.l.b16 %v342
        %v381 = vunpack.c.l.b16 %v343
        %v382 = vunpack.c.l.b16 %v344
        %v383 = vunpack.c.l.b16 %v345
        %v384 = vunpack.c.l.b16 %v346
        %v385 = vpack.c.b16 %v370, %v369
        %v386 = vpack.c.b16 %v372, %v371
        %v387 = vpack.c.b16 %v374, %v373
        %v388 = vpack.c.b16 %v376, %v375
        %v389 = vpack.c.b16 %v378, %v377
        %v390 = vpack.c.b16 %v380, %v379
        %v391 = vpack.c.b16 %v382, %v381
        %v392 = vpack.c.b16 %v384, %v383
        %401 = vmatprep.subr.bf16.mxu0 0
        %402 = vmatpush1.bf16.msra.mxu0 %v385
        %403 = vmatprep.subr.bf16.mxu0 0
        %404 = vmatpush1.bf16.msra.mxu0 %v386
        %405 = vmatprep.subr.bf16.mxu0 0
        %406 = vmatpush1.bf16.msra.mxu0 %v387
        %407 = vmatprep.subr.bf16.mxu0 0
        %408 = vmatpush1.bf16.msra.mxu0 %v388
        %409 = vmatprep.subr.bf16.mxu0 0
        %410 = vmatpush1.bf16.msra.mxu0 %v389
        %411 = vmatprep.subr.bf16.mxu0 0
        %412 = vmatpush1.bf16.msra.mxu0 %v390
        %413 = vmatprep.subr.bf16.mxu0 0
        %414 = vmatpush1.bf16.msra.mxu0 %v391
        %415 = vmatprep.subr.bf16.mxu0 0
        %416 = vmatpush1.bf16.msra.mxu0 %v392
        %417 = vmatprep.subr.bf16.mxu0 0
        %418 = vmatpush1.bf16.msra.mxu0 0
        %419 = vmatprep.subr.bf16.mxu0 0
        %420 = vmatpush1.bf16.msra.mxu0 0
        %421 = vmatprep.subr.bf16.mxu0 0
        %422 = vmatpush1.bf16.msra.mxu0 0
        %423 = vmatprep.subr.bf16.mxu0 0
        %424 = vmatpush1.bf16.msra.mxu0 0
        %425 = vmatprep.subr.bf16.mxu0 0
        %426 = vmatpush1.bf16.msra.mxu0 0
        %427 = vmatprep.subr.bf16.mxu0 0
        %428 = vmatpush1.bf16.msra.mxu0 0
        %429 = vmatprep.subr.bf16.mxu0 0
        %430 = vmatpush1.bf16.msra.mxu0 0
        %431 = vmatprep.subr.bf16.mxu0 0
        %432 = vmatpush1.bf16.msra.mxu0 0
        %433 = vmatprep.mubr.bf16.mxu0 0
        %434 = vmatmul.mubr.bf16.gmra.mrb[0].mxu0 %v323
        %v435 = vpop.f32.mrb[0].mxu0
        %v436 = vadd.f32 %v352, %v435
        %v437 = vpop.f32.mrb[0].mxu0
        %v438 = vpop.f32.mrb[0].mxu0
        %v439 = vadd.f32 %v352, %v438
        %v440 = vpop.f32.mrb[0].mxu0
        %441 = vmatprep.mubr.bf16.mxu0 0
        %442 = vmatmul.mubr.bf16.gmra.mrb[0].mxu0 %v324
        %v443 = vpop.f32.mrb[0].mxu0
        %v444 = vadd.f32 %v352, %v443
        %v445 = vpop.f32.mrb[0].mxu0
        %v446 = vpop.f32.mrb[0].mxu0
        %v447 = vadd.f32 %v352, %v446
        %v448 = vpop.f32.mrb[0].mxu0
        %449 = vmatprep.mubr.bf16.mxu0 0
        %450 = vmatmul.mubr.bf16.gmra.mrb[0].mxu0 %v325
        %v451 = vpop.f32.mrb[0].mxu0
        %v452 = vadd.f32 %v352, %v451
        %v453 = vpop.f32.mrb[0].mxu0
        %v454 = vpop.f32.mrb[0].mxu0
        %v455 = vadd.f32 %v352, %v454
        %v456 = vpop.f32.mrb[0].mxu0
        %457 = vmatprep.mubr.bf16.mxu0 0
        %458 = vmatmul.mubr.bf16.gmra.mrb[0].mxu0 %v326
        %v459 = vpop.f32.mrb[0].mxu0
        %v460 = vadd.f32 %v352, %v459
        %v461 = vpop.f32.mrb[0].mxu0
        %v462 = vpop.f32.mrb[0].mxu0
        %v463 = vadd.f32 %v352, %v462
        %v464 = vpop.f32.mrb[0].mxu0
        %465 = vmatprep.mubr.bf16.mxu0 0
        %466 = vmatmul.mubr.bf16.gmra.mrb[0].mxu0 %v327
        %v467 = vpop.f32.mrb[0].mxu0
        %v468 = vadd.f32 %v352, %v467
        %v469 = vpop.f32.mrb[0].mxu0
        %v470 = vpop.f32.mrb[0].mxu0
        %v471 = vadd.f32 %v352, %v470
        %v472 = vpop.f32.mrb[0].mxu0
        %473 = vmatprep.mubr.bf16.mxu0 0
        %474 = vmatmul.mubr.bf16.gmra.mrb[0].mxu0 %v328
        %v475 = vpop.f32.mrb[0].mxu0
        %v476 = vadd.f32 %v352, %v475
        %v477 = vpop.f32.mrb[0].mxu0
        %v478 = vpop.f32.mrb[0].mxu0
        %v479 = vadd.f32 %v352, %v478
        %v480 = vpop.f32.mrb[0].mxu0
        %481 = vmatprep.mubr.bf16.mxu0 0
        %482 = vmatmul.mubr.bf16.gmra.mrb[0].mxu0 %v329
        %v483 = vpop.f32.mrb[0].mxu0
        %v484 = vadd.f32 %v352, %v483
        %v485 = vpop.f32.mrb[0].mxu0
        %v486 = vpop.f32.mrb[0].mxu0
        %v487 = vadd.f32 %v352, %v486
        %v488 = vpop.f32.mrb[0].mxu0
        %489 = vmatprep.mubr.bf16.mxu0 0
        %490 = vmatmul.mubr.bf16.gmra.mrb[0].mxu0 %v330
        %v491 = vpop.f32.mrb[0].mxu0
        %v492 = vadd.f32 %v352, %v491
        %v493 = vpop.f32.mrb[0].mxu0
        %v494 = vpop.f32.mrb[0].mxu0
        %v495 = vadd.f32 %v352, %v494
        %v496 = vpop.f32.mrb[0].mxu0
        %497 = vdwg.mxu0
        %499 = vset.pattern.permute.xlu0 0
        %500 = vperm.xlu0 %499, %v291
        %v501 = vpop.permute.xlu0 %500
        %504 = vset.pattern.permute.xlu0 0
        %505 = vperm.xlu0 %504, %v292
        %v506 = vpop.permute.xlu0 %505
        %509 = vset.pattern.permute.xlu0 0
        %510 = vperm.xlu0 %509, %v293
        %v511 = vpop.permute.xlu0 %510
        %514 = vset.pattern.permute.xlu0 0
        %515 = vperm.xlu0 %514, %v294
        %v516 = vpop.permute.xlu0 %515
        %519 = vset.pattern.permute.xlu0 0
        %520 = vperm.xlu0 %519, %v295
        %v521 = vpop.permute.xlu0 %520
        %524 = vset.pattern.permute.xlu0 0
        %525 = vperm.xlu0 %524, %v296
        %v526 = vpop.permute.xlu0 %525
        %529 = vset.pattern.permute.xlu0 0
        %530 = vperm.xlu0 %529, %v297
        %v531 = vpop.permute.xlu0 %530
        %534 = vset.pattern.permute.xlu0 0
        %535 = vperm.xlu0 %534, %v298
        %v536 = vpop.permute.xlu0 %535
        %539 = vset.pattern.permute.xlu0 0
        %540 = vperm.xlu0 %539, %v299
        %v541 = vpop.permute.xlu0 %540
        %544 = vset.pattern.permute.xlu0 0
        %545 = vperm.xlu0 %544, %v300
        %v546 = vpop.permute.xlu0 %545
        %549 = vset.pattern.permute.xlu0 0
        %550 = vperm.xlu0 %549, %v301
        %v551 = vpop.permute.xlu0 %550
        %554 = vset.pattern.permute.xlu0 0
        %555 = vperm.xlu0 %554, %v302
        %v556 = vpop.permute.xlu0 %555
        %559 = vset.pattern.permute.xlu0 0
        %560 = vperm.xlu0 %559, %v303
        %v561 = vpop.permute.xlu0 %560
        %564 = vset.pattern.permute.xlu0 0
        %565 = vperm.xlu0 %564, %v304
        %v566 = vpop.permute.xlu0 %565
        %569 = vset.pattern.permute.xlu0 0
        %570 = vperm.xlu0 %569, %v305
        %v571 = vpop.permute.xlu0 %570
        %574 = vset.pattern.permute.xlu0 0
        %575 = vperm.xlu0 %574, %v306
        %v576 = vpop.permute.xlu0 %575
        %v578 = vmul.f32 %v436, %v501
        %v579 = vmul.f32 %v439, %v506
        %v580 = vmul.f32 %v444, %v511
        %v581 = vmul.f32 %v447, %v516
        %v582 = vmul.f32 %v452, %v521
        %v583 = vmul.f32 %v455, %v526
        %v584 = vmul.f32 %v460, %v531
        %v585 = vmul.f32 %v463, %v536
        %v586 = vmul.f32 %v468, %v541
        %v587 = vmul.f32 %v471, %v546
        %v588 = vmul.f32 %v476, %v551
        %v589 = vmul.f32 %v479, %v556
        %v590 = vmul.f32 %v484, %v561
        %v591 = vmul.f32 %v487, %v566
        %v592 = vmul.f32 %v492, %v571
        %v593 = vmul.f32 %v495, %v576
        %v594 = vadd.f32 %v307, %v578
        %v595 = vadd.f32 %v308, %v579
        %v596 = vadd.f32 %v309, %v580
        %v597 = vadd.f32 %v310, %v581
        %v598 = vadd.f32 %v311, %v582
        %v599 = vadd.f32 %v312, %v583
        %v600 = vadd.f32 %v313, %v584
        %v601 = vadd.f32 %v314, %v585
        %v602 = vadd.f32 %v315, %v586
        %v603 = vadd.f32 %v316, %v587
        %v604 = vadd.f32 %v317, %v588
        %v605 = vadd.f32 %v318, %v589
        %v606 = vadd.f32 %v319, %v590
        %v607 = vadd.f32 %v320, %v591
        %v608 = vadd.f32 %v321, %v592
        %v609 = vadd.f32 %v322, %v593
        %v610 = vpack.c.bf16 %v595, %v594
        %v611 = vpack.c.bf16 %v597, %v596
        %v612 = vpack.c.bf16 %v599, %v598
        %v613 = vpack.c.bf16 %v601, %v600
        %v614 = vpack.c.bf16 %v603, %v602
        %v615 = vpack.c.bf16 %v605, %v604
        %v616 = vpack.c.bf16 %v607, %v606
        %v617 = vpack.c.bf16 %v609, %v608
        %s618 = scalar_lea.vmem [#allocation2], 64
        %v619 = vld [vmem:[%s618] sm:$0xf]
        %v620 = vld [vmem:[%s618 + $0x4] sm:$0xf]
        %v621 = vld [vmem:[%s618 + $0x8] sm:$0xf]
        %v622 = vld [vmem:[%s618 + $0xc] sm:$0xf]
        %v623 = vld [vmem:[%s618 + $0x10] sm:$0xf]
        %v624 = vld [vmem:[%s618 + $0x14] sm:$0xf]
        %v625 = vld [vmem:[%s618 + $0x18] sm:$0xf]
        %v626 = vld [vmem:[%s618 + $0x1c] sm:$0xf]
        %v627 = vld [vmem:[%s618 + $0x20] sm:$0xf]
        %v628 = vld [vmem:[%s618 + $0x24] sm:$0xf]
        %v629 = vld [vmem:[%s618 + $0x28] sm:$0xf]
        %v630 = vld [vmem:[%s618 + $0x2c] sm:$0xf]
        %v631 = vld [vmem:[%s618 + $0x30] sm:$0xf]
        %v632 = vld [vmem:[%s618 + $0x34] sm:$0xf]
        %v633 = vld [vmem:[%s618 + $0x38] sm:$0xf]
        %v634 = vld [vmem:[%s618 + $0x3c] sm:$0xf]
        %s635 = scalar_lea.vmem %s3, 1
        %v636 = vld [vmem:[%s635] sm:$0x1]
        %v637 = vunpack.c.l.bf16 %v636
        %v638 = vlaneseq
        %v639 = vshrl.u32 %v638, 7
        %v640 = vsub.s32 0, %v639
        %v641 = vrot.slane %v637, %v640
        %v658 = vunpack.c.l.b16 %v619
        %v659 = vunpack.c.l.b16 %v620
        %v660 = vunpack.c.l.b16 %v621
        %v661 = vunpack.c.l.b16 %v622
        %v662 = vunpack.c.l.b16 %v623
        %v663 = vunpack.c.l.b16 %v624
        %v664 = vunpack.c.l.b16 %v625
        %v665 = vunpack.c.l.b16 %v626
        %v666 = vunpack.c.l.b16 %v627
        %v667 = vunpack.c.l.b16 %v628
        %v668 = vunpack.c.l.b16 %v629
        %v669 = vunpack.c.l.b16 %v630
        %v670 = vunpack.c.l.b16 %v631
        %v671 = vunpack.c.l.b16 %v632
        %v672 = vunpack.c.l.b16 %v633
        %v673 = vunpack.c.l.b16 %v634
        %v674 = vpack.c.b16 %v659, %v658
        %v675 = vpack.c.b16 %v661, %v660
        %v676 = vpack.c.b16 %v663, %v662
        %v677 = vpack.c.b16 %v665, %v664
        %v678 = vpack.c.b16 %v667, %v666
        %v679 = vpack.c.b16 %v669, %v668
        %v680 = vpack.c.b16 %v671, %v670
        %v681 = vpack.c.b16 %v673, %v672
        %690 = vmatprep.subr.bf16.mxu0 0
        %691 = vmatpush1.bf16.msra.mxu0 %v674
        %692 = vmatprep.subr.bf16.mxu0 0
        %693 = vmatpush1.bf16.msra.mxu0 %v675
        %694 = vmatprep.subr.bf16.mxu0 0
        %695 = vmatpush1.bf16.msra.mxu0 %v676
        %696 = vmatprep.subr.bf16.mxu0 0
        %697 = vmatpush1.bf16.msra.mxu0 %v677
        %698 = vmatprep.subr.bf16.mxu0 0
        %699 = vmatpush1.bf16.msra.mxu0 %v678
        %700 = vmatprep.subr.bf16.mxu0 0
        %701 = vmatpush1.bf16.msra.mxu0 %v679
        %702 = vmatprep.subr.bf16.mxu0 0
        %703 = vmatpush1.bf16.msra.mxu0 %v680
        %704 = vmatprep.subr.bf16.mxu0 0
        %705 = vmatpush1.bf16.msra.mxu0 %v681
        %706 = vmatprep.subr.bf16.mxu0 0
        %707 = vmatpush1.bf16.msra.mxu0 0
        %708 = vmatprep.subr.bf16.mxu0 0
        %709 = vmatpush1.bf16.msra.mxu0 0
        %710 = vmatprep.subr.bf16.mxu0 0
        %711 = vmatpush1.bf16.msra.mxu0 0
        %712 = vmatprep.subr.bf16.mxu0 0
        %713 = vmatpush1.bf16.msra.mxu0 0
        %714 = vmatprep.subr.bf16.mxu0 0
        %715 = vmatpush1.bf16.msra.mxu0 0
        %716 = vmatprep.subr.bf16.mxu0 0
        %717 = vmatpush1.bf16.msra.mxu0 0
        %718 = vmatprep.subr.bf16.mxu0 0
        %719 = vmatpush1.bf16.msra.mxu0 0
        %720 = vmatprep.subr.bf16.mxu0 0
        %721 = vmatpush1.bf16.msra.mxu0 0
        %722 = vmatprep.mubr.bf16.mxu0 0
        %723 = vmatmul.mubr.bf16.gmra.mrb[0].mxu0 %v610
        %v724 = vpop.f32.mrb[0].mxu0
        %v725 = vadd.f32 %v641, %v724
        %v726 = vpop.f32.mrb[0].mxu0
        %v727 = vpop.f32.mrb[0].mxu0
        %v728 = vadd.f32 %v641, %v727
        %v729 = vpop.f32.mrb[0].mxu0
        %730 = vmatprep.mubr.bf16.mxu0 0
        %731 = vmatmul.mubr.bf16.gmra.mrb[0].mxu0 %v611
        %v732 = vpop.f32.mrb[0].mxu0
        %v733 = vadd.f32 %v641, %v732
        %v734 = vpop.f32.mrb[0].mxu0
        %v735 = vpop.f32.mrb[0].mxu0
        %v736 = vadd.f32 %v641, %v735
        %v737 = vpop.f32.mrb[0].mxu0
        %738 = vmatprep.mubr.bf16.mxu0 0
        %739 = vmatmul.mubr.bf16.gmra.mrb[0].mxu0 %v612
        %v740 = vpop.f32.mrb[0].mxu0
        %v741 = vadd.f32 %v641, %v740
        %v742 = vpop.f32.mrb[0].mxu0
        %v743 = vpop.f32.mrb[0].mxu0
        %v744 = vadd.f32 %v641, %v743
        %v745 = vpop.f32.mrb[0].mxu0
        %746 = vmatprep.mubr.bf16.mxu0 0
        %747 = vmatmul.mubr.bf16.gmra.mrb[0].mxu0 %v613
        %v748 = vpop.f32.mrb[0].mxu0
        %v749 = vadd.f32 %v641, %v748
        %v750 = vpop.f32.mrb[0].mxu0
        %v751 = vpop.f32.mrb[0].mxu0
        %v752 = vadd.f32 %v641, %v751
        %v753 = vpop.f32.mrb[0].mxu0
        %754 = vmatprep.mubr.bf16.mxu0 0
        %755 = vmatmul.mubr.bf16.gmra.mrb[0].mxu0 %v614
        %v756 = vpop.f32.mrb[0].mxu0
        %v757 = vadd.f32 %v641, %v756
        %v758 = vpop.f32.mrb[0].mxu0
        %v759 = vpop.f32.mrb[0].mxu0
        %v760 = vadd.f32 %v641, %v759
        %v761 = vpop.f32.mrb[0].mxu0
        %762 = vmatprep.mubr.bf16.mxu0 0
        %763 = vmatmul.mubr.bf16.gmra.mrb[0].mxu0 %v615
        %v764 = vpop.f32.mrb[0].mxu0
        %v765 = vadd.f32 %v641, %v764
        %v766 = vpop.f32.mrb[0].mxu0
        %v767 = vpop.f32.mrb[0].mxu0
        %v768 = vadd.f32 %v641, %v767
        %v769 = vpop.f32.mrb[0].mxu0
        %770 = vmatprep.mubr.bf16.mxu0 0
        %771 = vmatmul.mubr.bf16.gmra.mrb[0].mxu0 %v616
        %v772 = vpop.f32.mrb[0].mxu0
        %v773 = vadd.f32 %v641, %v772
        %v774 = vpop.f32.mrb[0].mxu0
        %v775 = vpop.f32.mrb[0].mxu0
        %v776 = vadd.f32 %v641, %v775
        %v777 = vpop.f32.mrb[0].mxu0
        %778 = vmatprep.mubr.bf16.mxu0 0
        %779 = vmatmul.mubr.bf16.gmra.mrb[0].mxu0 %v617
        %v780 = vpop.f32.mrb[0].mxu0
        %v781 = vadd.f32 %v641, %v780
        %v782 = vpop.f32.mrb[0].mxu0
        %v783 = vpop.f32.mrb[0].mxu0
        %v784 = vadd.f32 %v641, %v783
        %v785 = vpop.f32.mrb[0].mxu0
        %786 = vdwg.mxu0
        %v787 = vmul.f32 %v725, %v501
        %v788 = vmul.f32 %v728, %v506
        %v789 = vmul.f32 %v733, %v511
        %v790 = vmul.f32 %v736, %v516
        %v791 = vmul.f32 %v741, %v521
        %v792 = vmul.f32 %v744, %v526
        %v793 = vmul.f32 %v749, %v531
        %v794 = vmul.f32 %v752, %v536
        %v795 = vmul.f32 %v757, %v541
        %v796 = vmul.f32 %v760, %v546
        %v797 = vmul.f32 %v765, %v551
        %v798 = vmul.f32 %v768, %v556
        %v799 = vmul.f32 %v773, %v561
        %v800 = vmul.f32 %v776, %v566
        %v801 = vmul.f32 %v781, %v571
        %v802 = vmul.f32 %v784, %v576
        %v803 = vadd.f32 %v594, %v787
        %v804 = vadd.f32 %v595, %v788
        %v805 = vadd.f32 %v596, %v789
        %v806 = vadd.f32 %v597, %v790
        %v807 = vadd.f32 %v598, %v791
        %v808 = vadd.f32 %v599, %v792
        %v809 = vadd.f32 %v600, %v793
        %v810 = vadd.f32 %v601, %v794
        %v811 = vadd.f32 %v602, %v795
        %v812 = vadd.f32 %v603, %v796
        %v813 = vadd.f32 %v604, %v797
        %v814 = vadd.f32 %v605, %v798
        %v815 = vadd.f32 %v606, %v799
        %v816 = vadd.f32 %v607, %v800
        %v817 = vadd.f32 %v608, %v801
        %v818 = vadd.f32 %v609, %v802
        %819 = vadd.xlane.f32.xlu0 %v803
        %v820 = vpop.xlane.xlu0 %819
        %821 = vadd.xlane.f32.xlu0 %v804
        %v822 = vpop.xlane.xlu0 %821
        %823 = vadd.xlane.f32.xlu0 %v805
        %v824 = vpop.xlane.xlu0 %823
        %825 = vadd.xlane.f32.xlu0 %v806
        %v826 = vpop.xlane.xlu0 %825
        %827 = vadd.xlane.f32.xlu0 %v807
        %v828 = vpop.xlane.xlu0 %827
        %829 = vadd.xlane.f32.xlu0 %v808
        %v830 = vpop.xlane.xlu0 %829
        %831 = vadd.xlane.f32.xlu0 %v809
        %v832 = vpop.xlane.xlu0 %831
        %833 = vadd.xlane.f32.xlu0 %v810
        %v834 = vpop.xlane.xlu0 %833
        %835 = vadd.xlane.f32.xlu0 %v811
        %v836 = vpop.xlane.xlu0 %835
        %837 = vadd.xlane.f32.xlu0 %v812
        %v838 = vpop.xlane.xlu0 %837
        %839 = vadd.xlane.f32.xlu0 %v813
        %v840 = vpop.xlane.xlu0 %839
        %841 = vadd.xlane.f32.xlu0 %v814
        %v842 = vpop.xlane.xlu0 %841
        %843 = vadd.xlane.f32.xlu0 %v815
        %v844 = vpop.xlane.xlu0 %843
        %845 = vadd.xlane.f32.xlu0 %v816
        %v846 = vpop.xlane.xlu0 %845
        %847 = vadd.xlane.f32.xlu0 %v817
        %v848 = vpop.xlane.xlu0 %847
        %849 = vadd.xlane.f32.xlu0 %v818
        %v850 = vpop.xlane.xlu0 %849
        %v851 = vrcp.pop 128.0
        %v852 = vmul.f32 %v820, %v851
        %v853 = vmul.f32 %v822, %v851
        %v854 = vmul.f32 %v824, %v851
        %v855 = vmul.f32 %v826, %v851
        %v856 = vmul.f32 %v828, %v851
        %v857 = vmul.f32 %v830, %v851
        %v858 = vmul.f32 %v832, %v851
        %v859 = vmul.f32 %v834, %v851
        %v860 = vmul.f32 %v836, %v851
        %v861 = vmul.f32 %v838, %v851
        %v862 = vmul.f32 %v840, %v851
        %v863 = vmul.f32 %v842, %v851
        %v864 = vmul.f32 %v844, %v851
        %v865 = vmul.f32 %v846, %v851
        %v866 = vmul.f32 %v848, %v851
        %v867 = vmul.f32 %v850, %v851
        %v868 = vsub.f32 %v803, %v852
        %v869 = vsub.f32 %v804, %v853
        %v870 = vsub.f32 %v805, %v854
        %v871 = vsub.f32 %v806, %v855
        %v872 = vsub.f32 %v807, %v856
        %v873 = vsub.f32 %v808, %v857
        %v874 = vsub.f32 %v809, %v858
        %v875 = vsub.f32 %v810, %v859
        %v876 = vsub.f32 %v811, %v860
        %v877 = vsub.f32 %v812, %v861
        %v878 = vsub.f32 %v813, %v862
        %v879 = vsub.f32 %v814, %v863
        %v880 = vsub.f32 %v815, %v864
        %v881 = vsub.f32 %v816, %v865
        %v882 = vsub.f32 %v817, %v866
        %v883 = vsub.f32 %v818, %v867
        %v884 = vmul.f32 %v868, %v868
        %v885 = vmul.f32 %v869, %v869
        %v886 = vmul.f32 %v870, %v870
        %v887 = vmul.f32 %v871, %v871
        %v888 = vmul.f32 %v872, %v872
        %v889 = vmul.f32 %v873, %v873
        %v890 = vmul.f32 %v874, %v874
        %v891 = vmul.f32 %v875, %v875
        %v892 = vmul.f32 %v876, %v876
        %v893 = vmul.f32 %v877, %v877
        %v894 = vmul.f32 %v878, %v878
        %v895 = vmul.f32 %v879, %v879
        %v896 = vmul.f32 %v880, %v880
        %v897 = vmul.f32 %v881, %v881
        %v898 = vmul.f32 %v882, %v882
        %v899 = vmul.f32 %v883, %v883
        %900 = vadd.xlane.f32.xlu0 %v884
        %v901 = vpop.xlane.xlu0 %900
        %902 = vadd.xlane.f32.xlu0 %v885
        %v903 = vpop.xlane.xlu0 %902
        %904 = vadd.xlane.f32.xlu0 %v886
        %v905 = vpop.xlane.xlu0 %904
        %906 = vadd.xlane.f32.xlu0 %v887
        %v907 = vpop.xlane.xlu0 %906
        %908 = vadd.xlane.f32.xlu0 %v888
        %v909 = vpop.xlane.xlu0 %908
        %910 = vadd.xlane.f32.xlu0 %v889
        %v911 = vpop.xlane.xlu0 %910
        %912 = vadd.xlane.f32.xlu0 %v890
        %v913 = vpop.xlane.xlu0 %912
        %914 = vadd.xlane.f32.xlu0 %v891
        %v915 = vpop.xlane.xlu0 %914
        %916 = vadd.xlane.f32.xlu0 %v892
        %v917 = vpop.xlane.xlu0 %916
        %918 = vadd.xlane.f32.xlu0 %v893
        %v919 = vpop.xlane.xlu0 %918
        %920 = vadd.xlane.f32.xlu0 %v894
        %v921 = vpop.xlane.xlu0 %920
        %922 = vadd.xlane.f32.xlu0 %v895
        %v923 = vpop.xlane.xlu0 %922
        %924 = vadd.xlane.f32.xlu0 %v896
        %v925 = vpop.xlane.xlu0 %924
        %926 = vadd.xlane.f32.xlu0 %v897
        %v927 = vpop.xlane.xlu0 %926
        %928 = vadd.xlane.f32.xlu0 %v898
        %v929 = vpop.xlane.xlu0 %928
        %930 = vadd.xlane.f32.xlu0 %v899
        %v931 = vpop.xlane.xlu0 %930
        %v932 = vrcp.pop 127.0
        %v933 = vmul.f32 %v901, %v932
        %v934 = vmul.f32 %v903, %v932
        %v935 = vmul.f32 %v905, %v932
        %v936 = vmul.f32 %v907, %v932
        %v937 = vmul.f32 %v909, %v932
        %v938 = vmul.f32 %v911, %v932
        %v939 = vmul.f32 %v913, %v932
        %v940 = vmul.f32 %v915, %v932
        %v941 = vmul.f32 %v917, %v932
        %v942 = vmul.f32 %v919, %v932
        %v943 = vmul.f32 %v921, %v932
        %v944 = vmul.f32 %v923, %v932
        %v945 = vmul.f32 %v925, %v932
        %v946 = vmul.f32 %v927, %v932
        %v947 = vmul.f32 %v929, %v932
        %v948 = vmul.f32 %v931, %v932
        %v949 = vrsqrt.pop %v933
        %v950 = vmul.f32 %v933, %v949
        %vm951 = vcmp.eq.f32.partialorder %v933, inf
        %v952 = vsel %vm951, %v933, %v950
        %vm953 = vcmp.eq.f32.partialorder %v933, 0.0
        %v954 = vand.u32 %v933, 2147483648
        %v955 = vsel %vm953, %v954, %v952
        %v956 = vrsqrt.pop %v934
        %v957 = vmul.f32 %v934, %v956
        %vm958 = vcmp.eq.f32.partialorder %v934, inf
        %v959 = vsel %vm958, %v934, %v957
        %vm960 = vcmp.eq.f32.partialorder %v934, 0.0
        %v961 = vand.u32 %v934, 2147483648
        %v962 = vsel %vm960, %v961, %v959
        %v963 = vrsqrt.pop %v935
        %v964 = vmul.f32 %v935, %v963
        %vm965 = vcmp.eq.f32.partialorder %v935, inf
        %v966 = vsel %vm965, %v935, %v964
        %vm967 = vcmp.eq.f32.partialorder %v935, 0.0
        %v968 = vand.u32 %v935, 2147483648
        %v969 = vsel %vm967, %v968, %v966
        %v970 = vrsqrt.pop %v936
        %v971 = vmul.f32 %v936, %v970
        %vm972 = vcmp.eq.f32.partialorder %v936, inf
        %v973 = vsel %vm972, %v936, %v971
        %vm974 = vcmp.eq.f32.partialorder %v936, 0.0
        %v975 = vand.u32 %v936, 2147483648
        %v976 = vsel %vm974, %v975, %v973
        %v977 = vrsqrt.pop %v937
        %v978 = vmul.f32 %v937, %v977
        %vm979 = vcmp.eq.f32.partialorder %v937, inf
        %v980 = vsel %vm979, %v937, %v978
        %vm981 = vcmp.eq.f32.partialorder %v937, 0.0
        %v982 = vand.u32 %v937, 2147483648
        %v983 = vsel %vm981, %v982, %v980
        %v984 = vrsqrt.pop %v938
        %v985 = vmul.f32 %v938, %v984
        %vm986 = vcmp.eq.f32.partialorder %v938, inf
        %v987 = vsel %vm986, %v938, %v985
        %vm988 = vcmp.eq.f32.partialorder %v938, 0.0
        %v989 = vand.u32 %v938, 2147483648
        %v990 = vsel %vm988, %v989, %v987
        %v991 = vrsqrt.pop %v939
        %v992 = vmul.f32 %v939, %v991
        %vm993 = vcmp.eq.f32.partialorder %v939, inf
        %v994 = vsel %vm993, %v939, %v992
        %vm995 = vcmp.eq.f32.partialorder %v939, 0.0
        %v996 = vand.u32 %v939, 2147483648
        %v997 = vsel %vm995, %v996, %v994
        %v998 = vrsqrt.pop %v940
        %v999 = vmul.f32 %v940, %v998
        %vm1000 = vcmp.eq.f32.partialorder %v940, inf
        %v1001 = vsel %vm1000, %v940, %v999
        %vm1002 = vcmp.eq.f32.partialorder %v940, 0.0
        %v1003 = vand.u32 %v940, 2147483648
        %v1004 = vsel %vm1002, %v1003, %v1001
        %v1005 = vrsqrt.pop %v941
        %v1006 = vmul.f32 %v941, %v1005
        %vm1007 = vcmp.eq.f32.partialorder %v941, inf
        %v1008 = vsel %vm1007, %v941, %v1006
        %vm1009 = vcmp.eq.f32.partialorder %v941, 0.0
        %v1010 = vand.u32 %v941, 2147483648
        %v1011 = vsel %vm1009, %v1010, %v1008
        %v1012 = vrsqrt.pop %v942
        %v1013 = vmul.f32 %v942, %v1012
        %vm1014 = vcmp.eq.f32.partialorder %v942, inf
        %v1015 = vsel %vm1014, %v942, %v1013
        %vm1016 = vcmp.eq.f32.partialorder %v942, 0.0
        %v1017 = vand.u32 %v942, 2147483648
        %v1018 = vsel %vm1016, %v1017, %v1015
        %v1019 = vrsqrt.pop %v943
        %v1020 = vmul.f32 %v943, %v1019
        %vm1021 = vcmp.eq.f32.partialorder %v943, inf
        %v1022 = vsel %vm1021, %v943, %v1020
        %vm1023 = vcmp.eq.f32.partialorder %v943, 0.0
        %v1024 = vand.u32 %v943, 2147483648
        %v1025 = vsel %vm1023, %v1024, %v1022
        %v1026 = vrsqrt.pop %v944
        %v1027 = vmul.f32 %v944, %v1026
        %vm1028 = vcmp.eq.f32.partialorder %v944, inf
        %v1029 = vsel %vm1028, %v944, %v1027
        %vm1030 = vcmp.eq.f32.partialorder %v944, 0.0
        %v1031 = vand.u32 %v944, 2147483648
        %v1032 = vsel %vm1030, %v1031, %v1029
        %v1033 = vrsqrt.pop %v945
        %v1034 = vmul.f32 %v945, %v1033
        %vm1035 = vcmp.eq.f32.partialorder %v945, inf
        %v1036 = vsel %vm1035, %v945, %v1034
        %vm1037 = vcmp.eq.f32.partialorder %v945, 0.0
        %v1038 = vand.u32 %v945, 2147483648
        %v1039 = vsel %vm1037, %v1038, %v1036
        %v1040 = vrsqrt.pop %v946
        %v1041 = vmul.f32 %v946, %v1040
        %vm1042 = vcmp.eq.f32.partialorder %v946, inf
        %v1043 = vsel %vm1042, %v946, %v1041
        %vm1044 = vcmp.eq.f32.partialorder %v946, 0.0
        %v1045 = vand.u32 %v946, 2147483648
        %v1046 = vsel %vm1044, %v1045, %v1043
        %v1047 = vrsqrt.pop %v947
        %v1048 = vmul.f32 %v947, %v1047
        %vm1049 = vcmp.eq.f32.partialorder %v947, inf
        %v1050 = vsel %vm1049, %v947, %v1048
        %vm1051 = vcmp.eq.f32.partialorder %v947, 0.0
        %v1052 = vand.u32 %v947, 2147483648
        %v1053 = vsel %vm1051, %v1052, %v1050
        %v1054 = vrsqrt.pop %v948
        %v1055 = vmul.f32 %v948, %v1054
        %vm1056 = vcmp.eq.f32.partialorder %v948, inf
        %v1057 = vsel %vm1056, %v948, %v1055
        %vm1058 = vcmp.eq.f32.partialorder %v948, 0.0
        %v1059 = vand.u32 %v948, 2147483648
        %v1060 = vsel %vm1058, %v1059, %v1057
        %v1061 = vadd.f32 %v955, 1e-06
        %v1062 = vadd.f32 %v962, 1e-06
        %v1063 = vadd.f32 %v969, 1e-06
        %v1064 = vadd.f32 %v976, 1e-06
        %v1065 = vadd.f32 %v983, 1e-06
        %v1066 = vadd.f32 %v990, 1e-06
        %v1067 = vadd.f32 %v997, 1e-06
        %v1068 = vadd.f32 %v1004, 1e-06
        %v1069 = vadd.f32 %v1011, 1e-06
        %v1070 = vadd.f32 %v1018, 1e-06
        %v1071 = vadd.f32 %v1025, 1e-06
        %v1072 = vadd.f32 %v1032, 1e-06
        %v1073 = vadd.f32 %v1039, 1e-06
        %v1074 = vadd.f32 %v1046, 1e-06
        %v1075 = vadd.f32 %v1053, 1e-06
        %v1076 = vadd.f32 %v1060, 1e-06
        %v1077 = vrcp.pop %v1061
        %v1078 = vrcp.pop %v1062
        %v1079 = vrcp.pop %v1063
        %v1080 = vrcp.pop %v1064
        %v1081 = vrcp.pop %v1065
        %v1082 = vrcp.pop %v1066
        %v1083 = vrcp.pop %v1067
        %v1084 = vrcp.pop %v1068
        %v1085 = vrcp.pop %v1069
        %v1086 = vrcp.pop %v1070
        %v1087 = vrcp.pop %v1071
        %v1088 = vrcp.pop %v1072
        %v1089 = vrcp.pop %v1073
        %v1090 = vrcp.pop %v1074
        %v1091 = vrcp.pop %v1075
        %v1092 = vrcp.pop %v1076
        %v1093 = vld [vmem:[%s4] sm:$0x1]
        %v1095 = vlaneseq
        %v1096 = vshrl.u32 %v1095, 7
        %v1097 = vsub.s32 0, %v1096
        %v1098 = vrot.slane %v1093, %v1097
        %v1100 = vmul.f32 %v1098, %v868
        %v1101 = vmul.f32 %v1098, %v869
        %v1102 = vmul.f32 %v1098, %v870
        %v1103 = vmul.f32 %v1098, %v871
        %v1104 = vmul.f32 %v1098, %v872
        %v1105 = vmul.f32 %v1098, %v873
        %v1106 = vmul.f32 %v1098, %v874
        %v1107 = vmul.f32 %v1098, %v875
        %v1108 = vmul.f32 %v1098, %v876
        %v1109 = vmul.f32 %v1098, %v877
        %v1110 = vmul.f32 %v1098, %v878
        %v1111 = vmul.f32 %v1098, %v879
        %v1112 = vmul.f32 %v1098, %v880
        %v1113 = vmul.f32 %v1098, %v881
        %v1114 = vmul.f32 %v1098, %v882
        %v1115 = vmul.f32 %v1098, %v883
        %v1116 = vmul.f32 %v1100, %v1077
        %v1117 = vmul.f32 %v1101, %v1078
        %v1118 = vmul.f32 %v1102, %v1079
        %v1119 = vmul.f32 %v1103, %v1080
        %v1120 = vmul.f32 %v1104, %v1081
        %v1121 = vmul.f32 %v1105, %v1082
        %v1122 = vmul.f32 %v1106, %v1083
        %v1123 = vmul.f32 %v1107, %v1084
        %v1124 = vmul.f32 %v1108, %v1085
        %v1125 = vmul.f32 %v1109, %v1086
        %v1126 = vmul.f32 %v1110, %v1087
        %v1127 = vmul.f32 %v1111, %v1088
        %v1128 = vmul.f32 %v1112, %v1089
        %v1129 = vmul.f32 %v1113, %v1090
        %v1130 = vmul.f32 %v1114, %v1091
        %v1131 = vmul.f32 %v1115, %v1092
        %v1132 = vld [vmem:[%s5] sm:$0x1]
        %v1134 = vlaneseq
        %v1135 = vshrl.u32 %v1134, 7
        %v1136 = vsub.s32 0, %v1135
        %v1137 = vrot.slane %v1132, %v1136
        %v1139 = vadd.f32 %v1116, %v1137
        %v1140 = vadd.f32 %v1117, %v1137
        %v1141 = vadd.f32 %v1118, %v1137
        %v1142 = vadd.f32 %v1119, %v1137
        %v1143 = vadd.f32 %v1120, %v1137
        %v1144 = vadd.f32 %v1121, %v1137
        %v1145 = vadd.f32 %v1122, %v1137
        %v1146 = vadd.f32 %v1123, %v1137
        %v1147 = vadd.f32 %v1124, %v1137
        %v1148 = vadd.f32 %v1125, %v1137
        %v1149 = vadd.f32 %v1126, %v1137
        %v1150 = vadd.f32 %v1127, %v1137
        %v1151 = vadd.f32 %v1128, %v1137
        %v1152 = vadd.f32 %v1129, %v1137
        %v1153 = vadd.f32 %v1130, %v1137
        %v1154 = vadd.f32 %v1131, %v1137
        %1155 = vst [vmem:[%s276] sm:$0xff] %v1139
        %1156 = vst [vmem:[%s276 + $0x8] sm:$0xff] %v1140
        %1157 = vst [vmem:[%s276 + $0x10] sm:$0xff] %v1141
        %1158 = vst [vmem:[%s276 + $0x18] sm:$0xff] %v1142
        %1159 = vst [vmem:[%s276 + $0x20] sm:$0xff] %v1143
        %1160 = vst [vmem:[%s276 + $0x28] sm:$0xff] %v1144
        %1161 = vst [vmem:[%s276 + $0x30] sm:$0xff] %v1145
        %1162 = vst [vmem:[%s276 + $0x38] sm:$0xff] %v1146
        %1163 = vst [vmem:[%s276 + $0x40] sm:$0xff] %v1147
        %1164 = vst [vmem:[%s276 + $0x48] sm:$0xff] %v1148
        %1165 = vst [vmem:[%s276 + $0x50] sm:$0xff] %v1149
        %1166 = vst [vmem:[%s276 + $0x58] sm:$0xff] %v1150
        %1167 = vst [vmem:[%s276 + $0x60] sm:$0xff] %v1151
        %1168 = vst [vmem:[%s276 + $0x68] sm:$0xff] %v1152
        %1169 = vst [vmem:[%s276 + $0x70] sm:$0xff] %v1153
        %1170 = vst [vmem:[%s276 + $0x78] sm:$0xff] %v1154
        %s1171 = sand.u32 %s165, 1
        %s1172 = scalar_lea.sflag [#allocation4], %s1171
        %s1173 = sand.u32 %s165, 1
        %s1174 = smul.addr %s1173, 128
        %s1175 = scalar_lea.vmem [#allocation5], %s1174
        // Predicated region
        $region49: #{tpu_custom_call.1} parent=43 // pred_check
          %p1176 = pneg %p175
        $region50: #{tpu_custom_call.1} parent=43 // pred_check_branch
          %1178 = sbr.rel (%p1176) target = $region52
        $region51: #{tpu_custom_call.1} parent=43 // pred_region
          %s1179 = smul.u32 16, %s21
          %s1181 = ssub.s32 2048, 2048
          %1182 = vsyncadd %s1172, %s1181
          %s1183 = smul.addr %s1179, 128
          %s1184 = scalar_lea.hbm %s6, %s1183
          %s1185 = sshll.u32 %s1175, 4
          %s1186 = int_to_ptr.vmem [resolvable:$true] %s1185
          %1191 = dma.vmem_to_hbm [thread:$0]  %s1186, 2048, %s1184, %s1172, 128, 128, 8
        $region52: #{tpu_custom_call.1} parent=43 // pred_fallthru
          _
      $region44: #{tpu_custom_call.1} parent=5 // pred_fallthru
        _
      %p1192 = scmp.le.s32.totalorder 2, %s16
      // Predicated region
      $region53: #{tpu_custom_call.1} parent=5 // pred_check
        %p1193 = pneg %p1192
      $region54: #{tpu_custom_call.1} parent=5 // pred_check_branch
        %1195 = sbr.rel (%p1193) target = $region56
      $region55: #{tpu_custom_call.1} parent=5 // pred_region
        %s1196 = ssub.s32 %s16, 2
        // Predicated region
        $region57: #{tpu_custom_call.1} parent=55 // pred_check
          %p1197 = pneg %p181
        $region58: #{tpu_custom_call.1} parent=55 // pred_check_branch
          %1199 = sbr.rel (%p1197) target = $region60
        $region59: #{tpu_custom_call.1} parent=55 // pred_region
          %s1200 = sand.u32 %s166, 1
          %s1201 = scalar_lea.sflag [#allocation4], %s1200
          %s1202 = sand.u32 %s166, 1
          %s1203 = smul.addr %s1202, 128
          %s1204 = scalar_lea.vmem [#allocation5], %s1203
          %1205 = dma.done %s1201, 2048
        $region60: #{tpu_custom_call.1} parent=55 // pred_fallthru
          _
      $region56: #{tpu_custom_call.1} parent=5 // pred_fallthru
        _
    $region6: #{tpu_custom_call.1} parent=1 // loop_footer
      %s20 = sadd.s32 1, %s16
    $region7: #{tpu_custom_call.1} parent=1 // loop_footer_branch
      %15 = sbr.rel target = $region3
    $region8: #{tpu_custom_call.1} parent=1 // loop_exit
      _
    %1206 = vsyncpa [#allocation3], 1
    %s1207 = scalar_lea.sflag [#allocation3], 1
    %1208 = vsyncpa %s1207, 1
    %1209 = vsyncpa [#allocation4], 1
    %s1210 = scalar_lea.sflag [#allocation4], 1
    %1211 = vsyncpa %s1210, 1

</llo_original>
